<compile_context>
chip_gen: v7x
topology: tpu7x:2x2x1
jax: 0.10.0
libtpu: 0.0.40
codegen_flags: <defaults>
</compile_context>

<pallas_src>
import functools

import jax
import jax.numpy as jnp
from jax.experimental import pallas as pl
from jax.experimental.pallas import tpu as pltpu

_LANE = 128


def _mlp_kernel(*refs, num_layers):
    """Fused MLP: refs = (x_ref, w0, b0, ..., w_{L-1}, b_{L-1}, o_ref)."""
    x_ref = refs[0]
    o_ref = refs[-1]
    wb_refs = refs[1:-1]

    x = x_ref[...]
    for layer in range(num_layers):
        w = wb_refs[2 * layer][...]
        b = wb_refs[2 * layer + 1][...]          # [1, out] -> broadcasts over batch
        y = jnp.dot(x, w, preferred_element_type=jnp.float32) + b
        if layer < num_layers - 1:
            x = jnp.maximum(y, 0.0)
        else:
            # softmax over dim=1 (feature axis), numerically stabilized.
            # Padded lanes carry a -1e30 bias -> exp underflows to 0, so they do
            # not perturb the real probabilities.
            m = jnp.max(y, axis=-1, keepdims=True)
            e = jnp.exp(y - m)
            denom = jnp.sum(e, axis=-1, keepdims=True)
            o_ref[...] = e * pl.reciprocal(denom, approx=False)


def _pick_batch_block(batch):
    """Largest batch block that is a multiple of 8 sublanes and divides B; else full B."""
    for bb in (512, 256, 128, 64, 32, 16, 8):
        if batch > bb and batch % bb == 0:
            return bb
    return batch


def _fused_mlp(state, params):
    """state: [B, Din]; params: list of (w:[Din_i, Dout_i], b:[1, Dout_i])."""
    B, Din = state.shape
    num_layers = len(params)
    action_size = params[-1][0].shape[1]

    # Lane-dense final output: pad action dim up to a multiple of 128.
    out_pad = ((action_size + _LANE - 1) // _LANE) * _LANE
    pad = out_pad - action_size
    w_last, b_last = params[-1]
    w_last_p = jnp.pad(w_last, ((0, 0), (0, pad)))
    b_last_p = jnp.pad(b_last, ((0, 0), (0, pad)), constant_values=-1e30)

    flat = []
    for w, b in params[:-1]:
        flat += [w, b]
    flat += [w_last_p, b_last_p]

    bb = _pick_batch_block(B)
    grid = (B // bb,)

    in_specs = [pl.BlockSpec((bb, Din), lambda i: (i, 0))]
    for w, b in zip(flat[0::2], flat[1::2]):
        in_specs.append(pl.BlockSpec(w.shape, lambda i: (0, 0)))
        in_specs.append(pl.BlockSpec(b.shape, lambda i: (0, 0)))

    kernel = functools.partial(_mlp_kernel, num_layers=num_layers)
    out = pl.pallas_call(
        kernel,
        out_shape=jax.ShapeDtypeStruct((B, out_pad), jnp.float32),
        grid=grid,
        in_specs=in_specs,
        out_specs=pl.BlockSpec((bb, out_pad), lambda i: (i, 0)),
        compiler_params=pltpu.CompilerParams(
            dimension_semantics=("parallel",),  # batch axis: pipeline + v7x 2-TC shard
        ),
    )(state, *flat)
    return out[:, :action_size]


@jax.jit
def model_forward(params, state):
    """Reproduces Model.forward: relu on all but last layer, softmax(dim=1) on last."""
    return _fused_mlp(state, params)


def init_params(key, state_size, action_size, hidden_layer_param):
    """Deterministic init mirroring nn.Linear's uniform(-1/sqrt(fan_in)) for w and b."""
    dims = [state_size] + list(hidden_layer_param) + [action_size]
    params = []
    for i in range(len(dims) - 1):
        key, kw, kb = jax.random.split(key, 3)
        bound = 1.0 / jnp.sqrt(dims[i])
        w = jax.random.uniform(kw, (dims[i], dims[i + 1]), jnp.float32, -bound, bound)
        b = jax.random.uniform(kb, (1, dims[i + 1]), jnp.float32, -bound, bound)
        params.append((w, b))
    return params


if __name__ == "__main__":
    # Small shapes consistent with the module: state_size=8, hidden=[32, 32], actions=4
    state_size = 8
    action_size = 4
    hidden_layer_param = [32, 32]
    batch = 2

    key = jax.random.PRNGKey(0)
    key, kx = jax.random.split(key)
    state = jax.random.normal(kx, (batch, state_size), jnp.float32)

    params = init_params(key, state_size, action_size, hidden_layer_param)

    probs = model_forward(params, state)
    probs = jax.block_until_ready(probs)

    # sanity: softmax rows sum to 1
    row_sums = jnp.sum(probs, axis=1)
    assert probs.shape == (batch, action_size)
    assert bool(jnp.all(probs >= 0.0))
    assert bool(jnp.all(jnp.abs(row_sums - 1.0) < 1e-5))

    print("KERNEL_OK")
</pallas_src>

<mosaic_0001>
module attributes {stable_mosaic.version = 11 : i64} {
  func.func @_mlp_kernel(%arg0: i32, %arg1: memref<2x8xf32, #tpu.memory_space<vmem>>, %arg2: memref<8x32xf32, #tpu.memory_space<vmem>>, %arg3: memref<1x32xf32, #tpu.memory_space<vmem>>, %arg4: memref<32x32xf32, #tpu.memory_space<vmem>>, %arg5: memref<1x32xf32, #tpu.memory_space<vmem>>, %arg6: memref<32x128xf32, #tpu.memory_space<vmem>>, %arg7: memref<1x128xf32, #tpu.memory_space<vmem>>, %arg8: memref<2x128xf32, #tpu.memory_space<vmem>>) attributes {dimension_semantics = [#tpu.dimension_semantics<parallel>], iteration_bounds = array<i64: 1>, scalar_prefetch = 0 : i64, scratch_operands = 0 : i64, tpu.core_type = #tpu.core_type<tc>, window_params = [{transform_indices = @transform_0, window_bounds = array<i64: 2, 8>}, {pipeline_mode = #tpu.pipeline_mode<synchronous>, transform_indices = @transform_1, window_bounds = array<i64: 8, 32>}, {pipeline_mode = #tpu.pipeline_mode<synchronous>, transform_indices = @transform_2, window_bounds = array<i64: 1, 32>}, {pipeline_mode = #tpu.pipeline_mode<synchronous>, transform_indices = @transform_3, window_bounds = array<i64: 32, 32>}, {pipeline_mode = #tpu.pipeline_mode<synchronous>, transform_indices = @transform_4, window_bounds = array<i64: 1, 32>}, {pipeline_mode = #tpu.pipeline_mode<synchronous>, transform_indices = @transform_5, window_bounds = array<i64: 32, 128>}, {pipeline_mode = #tpu.pipeline_mode<synchronous>, transform_indices = @transform_6, window_bounds = array<i64: 1, 128>}, {transform_indices = @transform_7, window_bounds = array<i64: 2, 128>}]} {
    %c0 = arith.constant 0 : index
    %c0_0 = arith.constant 0 : index
    %0 = vector.load %arg1[%c0, %c0_0] : memref<2x8xf32, #tpu.memory_space<vmem>>, vector<2x8xf32>
    %c0_1 = arith.constant 0 : index
    %c0_2 = arith.constant 0 : index
    %1 = vector.load %arg2[%c0_1, %c0_2] : memref<8x32xf32, #tpu.memory_space<vmem>>, vector<8x32xf32>
    %c0_3 = arith.constant 0 : index
    %c0_4 = arith.constant 0 : index
    %2 = vector.load %arg3[%c0_3, %c0_4] : memref<1x32xf32, #tpu.memory_space<vmem>>, vector<1x32xf32>
    %cst = arith.constant dense<0.000000e+00> : vector<2x32xf32>
    %3 = tpu.matmul %0, %1, %cst {dimension_numbers = #tpu.dot_dimension_numbers<[1], [0], [0], [1], [0, 0, 1, 1], [], []>} : vector<2x8xf32>, vector<8x32xf32>, vector<2x32xf32> -> vector<2x32xf32>
    %4 = vector.broadcast %2 : vector<1x32xf32> to vector<2x32xf32>
    %5 = arith.addf %3, %4 : vector<2x32xf32>
    %cst_5 = arith.constant 0.000000e+00 : f32
    %6 = vector.broadcast %cst_5 : f32 to vector<2x32xf32>
    %7 = arith.maximumf %5, %6 : vector<2x32xf32>
    %c0_6 = arith.constant 0 : index
    %c0_7 = arith.constant 0 : index
    %8 = vector.load %arg4[%c0_6, %c0_7] : memref<32x32xf32, #tpu.memory_space<vmem>>, vector<32x32xf32>
    %c0_8 = arith.constant 0 : index
    %c0_9 = arith.constant 0 : index
    %9 = vector.load %arg5[%c0_8, %c0_9] : memref<1x32xf32, #tpu.memory_space<vmem>>, vector<1x32xf32>
    %cst_10 = arith.constant dense<0.000000e+00> : vector<2x32xf32>
    %10 = tpu.matmul %7, %8, %cst_10 {dimension_numbers = #tpu.dot_dimension_numbers<[1], [0], [0], [1], [0, 0, 1, 1], [], []>} : vector<2x32xf32>, vector<32x32xf32>, vector<2x32xf32> -> vector<2x32xf32>
    %11 = vector.broadcast %9 : vector<1x32xf32> to vector<2x32xf32>
    %12 = arith.addf %10, %11 : vector<2x32xf32>
    %cst_11 = arith.constant 0.000000e+00 : f32
    %13 = vector.broadcast %cst_11 : f32 to vector<2x32xf32>
    %14 = arith.maximumf %12, %13 : vector<2x32xf32>
    %c0_12 = arith.constant 0 : index
    %c0_13 = arith.constant 0 : index
    %15 = vector.load %arg6[%c0_12, %c0_13] : memref<32x128xf32, #tpu.memory_space<vmem>>, vector<32x128xf32>
    %c0_14 = arith.constant 0 : index
    %c0_15 = arith.constant 0 : index
    %16 = vector.load %arg7[%c0_14, %c0_15] : memref<1x128xf32, #tpu.memory_space<vmem>>, vector<1x128xf32>
    %cst_16 = arith.constant dense<0.000000e+00> : vector<2x128xf32>
    %17 = tpu.matmul %14, %15, %cst_16 {dimension_numbers = #tpu.dot_dimension_numbers<[1], [0], [0], [1], [0, 0, 1, 1], [], []>} : vector<2x32xf32>, vector<32x128xf32>, vector<2x128xf32> -> vector<2x128xf32>
    %18 = vector.broadcast %16 : vector<1x128xf32> to vector<2x128xf32>
    %19 = arith.addf %17, %18 : vector<2x128xf32>
    %cst_17 = arith.constant dense<0xFF800000> : vector<2xf32>
    %20 = vector.multi_reduction <maximumf>, %19, %cst_17 [1] : vector<2x128xf32> to vector<2xf32>
    %21 = vector.shape_cast %20 : vector<2xf32> to vector<2x1xf32>
    %22 = vector.broadcast %21 : vector<2x1xf32> to vector<2x128xf32>
    %23 = arith.subf %19, %22 : vector<2x128xf32>
    %24 = math.exp %23 : vector<2x128xf32>
    %cst_18 = arith.constant dense<0.000000e+00> : vector<2xf32>
    %25 = vector.multi_reduction <add>, %24, %cst_18 [1] : vector<2x128xf32> to vector<2xf32>
    %26 = vector.shape_cast %25 : vector<2xf32> to vector<2x1xf32>
    %27 = tpu.reciprocal %26 : vector<2x1xf32> -> vector<2x1xf32>
    %28 = vector.broadcast %27 : vector<2x1xf32> to vector<2x128xf32>
    %29 = arith.mulf %24, %28 : vector<2x128xf32>
    %c0_19 = arith.constant 0 : index
    %c0_20 = arith.constant 0 : index
    %30 = vector.load %arg8[%c0_19, %c0_20] : memref<2x128xf32, #tpu.memory_space<vmem>>, vector<2x128xf32>
    tpu.vector_store %arg8[%c0_19, %c0_20], %29 {strides = array<i32>} : memref<2x128xf32, #tpu.memory_space<vmem>>, vector<2x128xf32>,
    return
  }
  func.func @transform_0(%arg0: i32) -> (i32, i32) {
    %c0_i32 = arith.constant 0 : i32
    %c0_i32_0 = arith.constant 0 : i32
    return %arg0, %c0_i32 : i32, i32
  }
  func.func @transform_1(%arg0: i32) -> (i32, i32) {
    %c0_i32 = arith.constant 0 : i32
    %c0_i32_0 = arith.constant 0 : i32
    %c0_i32_1 = arith.constant 0 : i32
    return %c0_i32, %c0_i32_0 : i32, i32
  }
  func.func @transform_2(%arg0: i32) -> (i32, i32) {
    %c0_i32 = arith.constant 0 : i32
    %c0_i32_0 = arith.constant 0 : i32
    %c0_i32_1 = arith.constant 0 : i32
    return %c0_i32, %c0_i32_0 : i32, i32
  }
  func.func @transform_3(%arg0: i32) -> (i32, i32) {
    %c0_i32 = arith.constant 0 : i32
    %c0_i32_0 = arith.constant 0 : i32
    %c0_i32_1 = arith.constant 0 : i32
    return %c0_i32, %c0_i32_0 : i32, i32
  }
  func.func @transform_4(%arg0: i32) -> (i32, i32) {
    %c0_i32 = arith.constant 0 : i32
    %c0_i32_0 = arith.constant 0 : i32
    %c0_i32_1 = arith.constant 0 : i32
    return %c0_i32, %c0_i32_0 : i32, i32
  }
  func.func @transform_5(%arg0: i32) -> (i32, i32) {
    %c0_i32 = arith.constant 0 : i32
    %c0_i32_0 = arith.constant 0 : i32
    %c0_i32_1 = arith.constant 0 : i32
    return %c0_i32, %c0_i32_0 : i32, i32
  }
  func.func @transform_6(%arg0: i32) -> (i32, i32) {
    %c0_i32 = arith.constant 0 : i32
    %c0_i32_0 = arith.constant 0 : i32
    %c0_i32_1 = arith.constant 0 : i32
    return %c0_i32, %c0_i32_0 : i32, i32
  }
  func.func @transform_7(%arg0: i32) -> (i32, i32) {
    %c0_i32 = arith.constant 0 : i32
    %c0_i32_0 = arith.constant 0 : i32
    return %arg0, %c0_i32 : i32, i32
  }
}

</mosaic_0001>

<llo_original>
// kernel: model_forward.1
$region0: #{model_forward.1}
  #allocation0 [shape = 'u32[]', space=smem, size = 0x4, offset = 0x4, fixed_abs, tag = 'smem constant byte address 0x4 - core index']
  #allocation1 [shape = 'u32[144,128]{1,0:T(1,128)}', space=vmem, size = 0x12000, scoped, tag = 'internal scratch']
  %s0 = inlined_call_operand.vmem [shape: f32[2,8], index: 0, kind: input, shape index: {}]
  %s1 = inlined_call_operand.vmem [shape: f32[8,32], index: 1, kind: input, shape index: {}]
  %s2 = inlined_call_operand.vmem [shape: f32[1,32], index: 2, kind: input, shape index: {}]
  %s3 = inlined_call_operand.vmem [shape: f32[32,32], index: 3, kind: input, shape index: {}]
  %s4 = inlined_call_operand.vmem [shape: f32[1,32], index: 4, kind: input, shape index: {}]
  %s5 = inlined_call_operand.vmem [shape: f32[32,128], index: 5, kind: input, shape index: {}]
  %s6 = inlined_call_operand.vmem [shape: f32[1,128], index: 6, kind: input, shape index: {}]
  %s7 = inlined_call_operand.hbm [shape: f32[2,128], index: 7, kind: output, shape index: {}]
  %s8 = sld [smem:[#allocation0]]
  $region38: #{model_forward.1} parent=0
    _
  %s10 = ssub.s32 1, %s8
  %s11 = scalar_select 0, %s10, %s8
  $region1: #{model_forward.1} parent=0
    #allocation2 [shape = 'u8[1024]{0}', space=vmem, size = 0x400, scoped, tag = 'output window, operand 0, single buffered']
    #allocation3 [shape = 's32[1]{0}', space=sflag, size = 0x4, scoped, tag = 'scoped memory for model_forward.1']
    %12 = vsyncpa [#allocation3], 0
    // Predicated region
    $region2: #{model_forward.1} parent=1 // pred_check
      _
    $region3: #{model_forward.1} parent=1 // pred_check_branch
      %14 = sbr.rel (0) target = $region5
    $region4: #{model_forward.1} parent=1 // pred_region
      _
    $region5: #{model_forward.1} parent=1 // pred_fallthru
      _
    // Predicated region
    $region6: #{model_forward.1} parent=1 // pred_check
      _
    $region7: #{model_forward.1} parent=1 // pred_check_branch
      %16 = sbr.rel (0) target = $region9
    $region8: #{model_forward.1} parent=1 // pred_region
      _
    $region9: #{model_forward.1} parent=1 // pred_fallthru
      _
    // Predicated region
    $region10: #{model_forward.1} parent=1 // pred_check
      _
    $region11: #{model_forward.1} parent=1 // pred_check_branch
      %18 = sbr.rel (0) target = $region13
    $region12: #{model_forward.1} parent=1 // pred_region
      _
    $region13: #{model_forward.1} parent=1 // pred_fallthru
      _
    // Predicated region
    $region14: #{model_forward.1} parent=1 // pred_check
      _
    $region15: #{model_forward.1} parent=1 // pred_check_branch
      %20 = sbr.rel (0) target = $region17
    $region16: #{model_forward.1} parent=1 // pred_region
      _
    $region17: #{model_forward.1} parent=1 // pred_fallthru
      _
    // Predicated region
    $region18: #{model_forward.1} parent=1 // pred_check
      _
    $region19: #{model_forward.1} parent=1 // pred_check_branch
      %22 = sbr.rel (0) target = $region21
    $region20: #{model_forward.1} parent=1 // pred_region
      _
    $region21: #{model_forward.1} parent=1 // pred_fallthru
      _
    // Predicated region
    $region22: #{model_forward.1} parent=1 // pred_check
      _
    $region23: #{model_forward.1} parent=1 // pred_check_branch
      %24 = sbr.rel (0) target = $region25
    $region24: #{model_forward.1} parent=1 // pred_region
      _
    $region25: #{model_forward.1} parent=1 // pred_fallthru
      _
    // Predicated region
    $region26: #{model_forward.1} parent=1 // pred_check
      _
    $region27: #{model_forward.1} parent=1 // pred_check_branch
      %26 = sbr.rel (0) target = $region29
    $region28: #{model_forward.1} parent=1 // pred_region
      _
    $region29: #{model_forward.1} parent=1 // pred_fallthru
      _
    %v27 = vld [vmem:[%s0] sm:$0x3]
    %v28 = vld [vmem:[%s1] sm:$0xff]
    %v29 = vld [vmem:[%s2] sm:$0x1]
    %v31 = vlaneseq
    %v32 = vshrl.u32 %v31, 7
    %v33 = vsub.s32 0, %v32
    %v34 = vrot.slane %v29, %v33
    %vm36 = vcmask 64512
    %v38 = vsel %vm36, %v27, 0
    %40 = vmatprep.subr.mxu0 0.0
    %41 = vmatpush1.msra.mxu0 %v28
    %42 = vmatprep.subr.mxu0 0.0
    %43 = vmatpush1.msra.mxu0 0.0
    %44 = vmatprep.subr.mxu0 0.0
    %45 = vmatpush1.msra.mxu0 0.0
    %46 = vmatprep.subr.mxu0 0.0
    %47 = vmatpush1.msra.mxu0 0.0
    %48 = vmatprep.subr.mxu0 0.0
    %49 = vmatpush1.msra.mxu0 0.0
    %50 = vmatprep.subr.mxu0 0.0
    %51 = vmatpush1.msra.mxu0 0.0
    %52 = vmatprep.subr.mxu0 0.0
    %53 = vmatpush1.msra.mxu0 0.0
    %54 = vmatprep.subr.mxu0 0.0
    %55 = vmatpush1.msra.mxu0 0.0
    %56 = vmatprep.subr.mxu0 0.0
    %57 = vmatpush1.msra.mxu0 0.0
    %58 = vmatprep.subr.mxu0 0.0
    %59 = vmatpush1.msra.mxu0 0.0
    %60 = vmatprep.subr.mxu0 0.0
    %61 = vmatpush1.msra.mxu0 0.0
    %62 = vmatprep.subr.mxu0 0.0
    %63 = vmatpush1.msra.mxu0 0.0
    %64 = vmatprep.subr.mxu0 0.0
    %65 = vmatpush1.msra.mxu0 0.0
    %66 = vmatprep.subr.mxu0 0.0
    %67 = vmatpush1.msra.mxu0 0.0
    %68 = vmatprep.subr.mxu0 0.0
    %69 = vmatpush1.msra.mxu0 0.0
    %70 = vmatprep.subr.mxu0 0.0
    %71 = vmatpush1.msra.mxu0 0.0
    %72 = vmatprep.subr.mxu0 0.0
    %73 = vmatpush1.msra.mxu0 0.0
    %74 = vmatprep.subr.mxu0 0.0
    %75 = vmatpush1.msra.mxu0 0.0
    %76 = vmatprep.subr.mxu0 0.0
    %77 = vmatpush1.msra.mxu0 0.0
    %78 = vmatprep.subr.mxu0 0.0
    %79 = vmatpush1.msra.mxu0 0.0
    %80 = vmatprep.subr.mxu0 0.0
    %81 = vmatpush1.msra.mxu0 0.0
    %82 = vmatprep.subr.mxu0 0.0
    %83 = vmatpush1.msra.mxu0 0.0
    %84 = vmatprep.subr.mxu0 0.0
    %85 = vmatpush1.msra.mxu0 0.0
    %86 = vmatprep.subr.mxu0 0.0
    %87 = vmatpush1.msra.mxu0 0.0
    %88 = vmatprep.subr.mxu0 0.0
    %89 = vmatpush1.msra.mxu0 0.0
    %90 = vmatprep.subr.mxu0 0.0
    %91 = vmatpush1.msra.mxu0 0.0
    %92 = vmatprep.subr.mxu0 0.0
    %93 = vmatpush1.msra.mxu0 0.0
    %94 = vmatprep.subr.mxu0 0.0
    %95 = vmatpush1.msra.mxu0 0.0
    %96 = vmatprep.subr.mxu0 0.0
    %97 = vmatpush1.msra.mxu0 0.0
    %98 = vmatprep.subr.mxu0 0.0
    %99 = vmatpush1.msra.mxu0 0.0
    %100 = vmatprep.subr.mxu0 0.0
    %101 = vmatpush1.msra.mxu0 0.0
    %102 = vmatprep.subr.mxu0 0.0
    %103 = vmatpush1.msra.mxu0 0.0
    %104 = vmatprep.mubr.f32.mxu0 0.0
    %105 = vmatmul.mubr.f32.gmra.mrb[0].mxu0 %v38
    %v106 = vpop.f32.mrb[0].mxu0
    %v107 = vadd.f32 %v34, %v106
    %v108 = vpop.f32.mrb[0].mxu0
    %109 = vdwg.mxu0
    %v110 = vmax.f32 %v107, 0.0
    %v111 = vld [vmem:[%s3] sm:$0xff]
    %v112 = vld [vmem:[%s3 + $0x8] sm:$0xff]
    %v113 = vld [vmem:[%s3 + $0x10] sm:$0xff]
    %v114 = vld [vmem:[%s3 + $0x18] sm:$0xff]
    %v115 = vld [vmem:[%s4] sm:$0x1]
    %v117 = vlaneseq
    %v118 = vshrl.u32 %v117, 7
    %v119 = vsub.s32 0, %v118
    %v120 = vrot.slane %v115, %v119
    %vm122 = vcmask 261120
    %v124 = vsel %vm122, %v110, 0
    %126 = vmatprep.subr.mxu0 0.0
    %127 = vmatpush1.msra.mxu0 %v111
    %128 = vmatprep.subr.mxu0 0.0
    %129 = vmatpush1.msra.mxu0 %v112
    %130 = vmatprep.subr.mxu0 0.0
    %131 = vmatpush1.msra.mxu0 %v113
    %132 = vmatprep.subr.mxu0 0.0
    %133 = vmatpush1.msra.mxu0 %v114
    %134 = vmatprep.subr.mxu0 0.0
    %135 = vmatpush1.msra.mxu0 0.0
    %136 = vmatprep.subr.mxu0 0.0
    %137 = vmatpush1.msra.mxu0 0.0
    %138 = vmatprep.subr.mxu0 0.0
    %139 = vmatpush1.msra.mxu0 0.0
    %140 = vmatprep.subr.mxu0 0.0
    %141 = vmatpush1.msra.mxu0 0.0
    %142 = vmatprep.subr.mxu0 0.0
    %143 = vmatpush1.msra.mxu0 0.0
    %144 = vmatprep.subr.mxu0 0.0
    %145 = vmatpush1.msra.mxu0 0.0
    %146 = vmatprep.subr.mxu0 0.0
    %147 = vmatpush1.msra.mxu0 0.0
    %148 = vmatprep.subr.mxu0 0.0
    %149 = vmatpush1.msra.mxu0 0.0
    %150 = vmatprep.subr.mxu0 0.0
    %151 = vmatpush1.msra.mxu0 0.0
    %152 = vmatprep.subr.mxu0 0.0
    %153 = vmatpush1.msra.mxu0 0.0
    %154 = vmatprep.subr.mxu0 0.0
    %155 = vmatpush1.msra.mxu0 0.0
    %156 = vmatprep.subr.mxu0 0.0
    %157 = vmatpush1.msra.mxu0 0.0
    %158 = vmatprep.subr.mxu0 0.0
    %159 = vmatpush1.msra.mxu0 0.0
    %160 = vmatprep.subr.mxu0 0.0
    %161 = vmatpush1.msra.mxu0 0.0
    %162 = vmatprep.subr.mxu0 0.0
    %163 = vmatpush1.msra.mxu0 0.0
    %164 = vmatprep.subr.mxu0 0.0
    %165 = vmatpush1.msra.mxu0 0.0
    %166 = vmatprep.subr.mxu0 0.0
    %167 = vmatpush1.msra.mxu0 0.0
    %168 = vmatprep.subr.mxu0 0.0
    %169 = vmatpush1.msra.mxu0 0.0
    %170 = vmatprep.subr.mxu0 0.0
    %171 = vmatpush1.msra.mxu0 0.0
    %172 = vmatprep.subr.mxu0 0.0
    %173 = vmatpush1.msra.mxu0 0.0
    %174 = vmatprep.subr.mxu0 0.0
    %175 = vmatpush1.msra.mxu0 0.0
    %176 = vmatprep.subr.mxu0 0.0
    %177 = vmatpush1.msra.mxu0 0.0
    %178 = vmatprep.subr.mxu0 0.0
    %179 = vmatpush1.msra.mxu0 0.0
    %180 = vmatprep.subr.mxu0 0.0
    %181 = vmatpush1.msra.mxu0 0.0
    %182 = vmatprep.subr.mxu0 0.0
    %183 = vmatpush1.msra.mxu0 0.0
    %184 = vmatprep.subr.mxu0 0.0
    %185 = vmatpush1.msra.mxu0 0.0
    %186 = vmatprep.subr.mxu0 0.0
    %187 = vmatpush1.msra.mxu0 0.0
    %188 = vmatprep.subr.mxu0 0.0
    %189 = vmatpush1.msra.mxu0 0.0
    %190 = vmatprep.mubr.f32.mxu0 0.0
    %191 = vmatmul.mubr.f32.gmra.mrb[0].mxu0 %v124
    %v192 = vpop.f32.mrb[0].mxu0
    %v193 = vadd.f32 %v120, %v192
    %v194 = vpop.f32.mrb[0].mxu0
    %195 = vdwg.mxu0
    %v196 = vmax.f32 %v193, 0.0
    %v197 = vld [vmem:[%s5] sm:$0xff]
    %v198 = vld [vmem:[%s5 + $0x8] sm:$0xff]
    %v199 = vld [vmem:[%s5 + $0x10] sm:$0xff]
    %v200 = vld [vmem:[%s5 + $0x18] sm:$0xff]
    %v201 = vld [vmem:[%s6] sm:$0x1]
    %v203 = vlaneseq
    %v204 = vshrl.u32 %v203, 7
    %v205 = vsub.s32 0, %v204
    %v206 = vrot.slane %v201, %v205
    %v209 = vsel %vm122, %v196, 0
    %211 = vmatprep.subr.mxu0 0.0
    %212 = vmatpush1.msra.mxu0 %v197
    %213 = vmatprep.subr.mxu0 0.0
    %214 = vmatpush1.msra.mxu0 %v198
    %215 = vmatprep.subr.mxu0 0.0
    %216 = vmatpush1.msra.mxu0 %v199
    %217 = vmatprep.subr.mxu0 0.0
    %218 = vmatpush1.msra.mxu0 %v200
    %219 = vmatprep.subr.mxu0 0.0
    %220 = vmatpush1.msra.mxu0 0.0
    %221 = vmatprep.subr.mxu0 0.0
    %222 = vmatpush1.msra.mxu0 0.0
    %223 = vmatprep.subr.mxu0 0.0
    %224 = vmatpush1.msra.mxu0 0.0
    %225 = vmatprep.subr.mxu0 0.0
    %226 = vmatpush1.msra.mxu0 0.0
    %227 = vmatprep.subr.mxu0 0.0
    %228 = vmatpush1.msra.mxu0 0.0
    %229 = vmatprep.subr.mxu0 0.0
    %230 = vmatpush1.msra.mxu0 0.0
    %231 = vmatprep.subr.mxu0 0.0
    %232 = vmatpush1.msra.mxu0 0.0
    %233 = vmatprep.subr.mxu0 0.0
    %234 = vmatpush1.msra.mxu0 0.0
    %235 = vmatprep.subr.mxu0 0.0
    %236 = vmatpush1.msra.mxu0 0.0
    %237 = vmatprep.subr.mxu0 0.0
    %238 = vmatpush1.msra.mxu0 0.0
    %239 = vmatprep.subr.mxu0 0.0
    %240 = vmatpush1.msra.mxu0 0.0
    %241 = vmatprep.subr.mxu0 0.0
    %242 = vmatpush1.msra.mxu0 0.0
    %243 = vmatprep.subr.mxu0 0.0
    %244 = vmatpush1.msra.mxu0 0.0
    %245 = vmatprep.subr.mxu0 0.0
    %246 = vmatpush1.msra.mxu0 0.0
    %247 = vmatprep.subr.mxu0 0.0
    %248 = vmatpush1.msra.mxu0 0.0
    %249 = vmatprep.subr.mxu0 0.0
    %250 = vmatpush1.msra.mxu0 0.0
    %251 = vmatprep.subr.mxu0 0.0
    %252 = vmatpush1.msra.mxu0 0.0
    %253 = vmatprep.subr.mxu0 0.0
    %254 = vmatpush1.msra.mxu0 0.0
    %255 = vmatprep.subr.mxu0 0.0
    %256 = vmatpush1.msra.mxu0 0.0
    %257 = vmatprep.subr.mxu0 0.0
    %258 = vmatpush1.msra.mxu0 0.0
    %259 = vmatprep.subr.mxu0 0.0
    %260 = vmatpush1.msra.mxu0 0.0
    %261 = vmatprep.subr.mxu0 0.0
    %262 = vmatpush1.msra.mxu0 0.0
    %263 = vmatprep.subr.mxu0 0.0
    %264 = vmatpush1.msra.mxu0 0.0
    %265 = vmatprep.subr.mxu0 0.0
    %266 = vmatpush1.msra.mxu0 0.0
    %267 = vmatprep.subr.mxu0 0.0
    %268 = vmatpush1.msra.mxu0 0.0
    %269 = vmatprep.subr.mxu0 0.0
    %270 = vmatpush1.msra.mxu0 0.0
    %271 = vmatprep.subr.mxu0 0.0
    %272 = vmatpush1.msra.mxu0 0.0
    %273 = vmatprep.subr.mxu0 0.0
    %274 = vmatpush1.msra.mxu0 0.0
    %275 = vmatprep.mubr.f32.mxu0 0.0
    %276 = vmatmul.mubr.f32.gmra.mrb[0].mxu0 %v209
    %v277 = vpop.f32.mrb[0].mxu0
    %v278 = vadd.f32 %v206, %v277
    %v279 = vpop.f32.mrb[0].mxu0
    %280 = vdwg.mxu0
    %vm281 = vcmask 1041408
    %v282 = vsel %vm281, %v278, -inf
    %283 = vmax.xlane.f32.xlu0 %v282
    %v284 = vpop.xlane.xlu0 %283
    %v285 = vsub.f32 %v278, %v284
    %v286 = vmul.f32 %v285, 1.442695
    %v287 = vpow.pop %v286
    %v288 = vsel %vm281, %v287, 0.0
    %289 = vadd.xlane.f32.xlu0 %v288
    %v290 = vpop.xlane.xlu0 %289
    %v291 = vrcp.pop %v290
    %v292 = vmul.f32 %v287, %v291
    %293 = vst [vmem:[#allocation2] sm:$0x3] %v292
    // Predicated region
    $region30: #{model_forward.1} parent=1 // pred_check
      _
    $region31: #{model_forward.1} parent=1 // pred_check_branch
      %295 = sbr.rel (0) target = $region33
    $region32: #{model_forward.1} parent=1 // pred_region
      %s297 = ssub.s32 32, 32
      %298 = vsyncadd [#allocation3], %s297
      %s300 = sshll.u32 [#allocation2], 4
      %s301 = int_to_ptr.vmem [resolvable:$true] %s300
      %303 = dma.vmem_to_hbm [thread:$0]  %s301, 32, %s7, [#allocation3]
    $region33: #{model_forward.1} parent=1 // pred_fallthru
      _
    // Predicated region
    $region34: #{model_forward.1} parent=1 // pred_check
      _
    $region35: #{model_forward.1} parent=1 // pred_check_branch
      %305 = sbr.rel (0) target = $region37
    $region36: #{model_forward.1} parent=1 // pred_region
      %306 = dma.done [#allocation3], 32
    $region37: #{model_forward.1} parent=1 // pred_fallthru
      _
    %307 = vsyncpa [#allocation3], 1

</llo_original>
